<compile_context>
chip_gen: v7x
topology: tpu7x:2x2x1
jax: 0.10.0
libtpu: 0.0.40
codegen_flags: <defaults>
</compile_context>

<pallas_src>
import functools

import jax
import jax.numpy as jnp
from jax.experimental import pallas as pl
from jax.experimental.pallas import tpu as pltpu

LANE = 128
SUBLANE = 8


def _minmax_kernel(x_ref, o_ref, *, min_val, max_val):
    # Works for both block layouts: (N, tile_s, 128) and (N, tile_f).
    # Axis 0 is always the full reduction (batch) axis of the original input.
    xf = x_ref[...].astype(jnp.float32)
    x_min = jnp.min(xf, axis=0, keepdims=True)
    x_max = jnp.max(xf, axis=0, keepdims=True)
    # One reciprocal per column instead of a divide per element; exact
    # (approx=False) to stay within ~1e-6 of the PyTorch divide.
    scale = (max_val - min_val) * pl.reciprocal(
        x_max - x_min + 1e-10, approx=False
    )
    # Keep the (x - x_min) form (not fully folded) so degenerate constant
    # columns map exactly to min_val, matching PyTorch.
    o_ref[...] = ((xf - x_min) * scale + min_val).astype(o_ref.dtype)


def _target_block_bytes():
    """~2 MiB of input per block, capped by per-generation VMEM capacity."""
    try:
        vmem_cap = pltpu.get_tpu_info().vmem_capacity_bytes
    except Exception:  # pragma: no cover - conservative fallback
        vmem_cap = 64 * 1024 * 1024
    # 2 MiB is well past the lane-width knee of the HBM roofline; the cap
    # keeps double-buffered in+out plus f32 temps comfortably resident even
    # on v7x's 64 MiB/TC.
    return min(2 * 1024 * 1024, vmem_cap // 24)


def _tile_s_3d(n, s, itemsize, requested_cols):
    """S-axis tile (units of 128-lane columns) for the (N, S, 128) layout."""
    if requested_cols is None:
        req = max(1, _target_block_bytes() // (n * LANE * itemsize))
    else:
        req = max(1, requested_cols // LANE)
    if req >= s:
        return s  # single full-extent block: small-problem fast path
    return min(s, max(SUBLANE, (req // SUBLANE) * SUBLANE))


def _tile_f_2d(n, f, itemsize, requested_cols):
    """F-axis tile (flattened feature elements) for the 2D (N, F) layout."""
    rows_padded = ((n + SUBLANE - 1) // SUBLANE) * SUBLANE
    if requested_cols is None:
        req = max(LANE, _target_block_bytes() // (rows_padded * itemsize))
    else:
        req = requested_cols
    if req >= f:
        return f  # single full-extent block (no lane alignment needed)
    return max(LANE, (req // LANE) * LANE)


def min_max_normalize(x, min_val=0.0, max_val=1.0, *, tile_cols=None):
    """Min-max normalize over dim 0, matching MinMaxNormalize.forward.

    `tile_cols` (optional) forces the number of flattened feature elements
    per block (testing hook for the multi-block pipelined paths).
    """
    orig_shape = x.shape
    orig_dtype = x.dtype
    n = orig_shape[0]
    f = 1
    for d in orig_shape[1:]:
        f *= d

    itemsize = jnp.dtype(orig_dtype).itemsize
    kernel = functools.partial(
        _minmax_kernel, min_val=float(min_val), max_val=float(max_val)
    )
    compiler_params = pltpu.CompilerParams(
        dimension_semantics=("parallel",),
        vmem_limit_bytes=32 * 1024 * 1024,
    )

    if f % LANE == 0:
        # Lane-aligned feature count: compact (N, S, 128) layout. Reduction
        # axis is the leading, untiled dim; sublanes fully packed for any N;
        # every store is an unmasked 128-lane store.
        s = f // LANE
        x3d = x.reshape(n, s, LANE)
        ts = _tile_s_3d(n, s, itemsize, tile_cols)
        out = pl.pallas_call(
            kernel,
            out_shape=jax.ShapeDtypeStruct((n, s, LANE), orig_dtype),
            grid_spec=pltpu.PrefetchScalarGridSpec(
                num_scalar_prefetch=0,
                grid=(pl.cdiv(s, ts),),
                in_specs=[pl.BlockSpec((n, ts, LANE), lambda j: (0, j, 0))],
                out_specs=pl.BlockSpec((n, ts, LANE), lambda j: (0, j, 0)),
            ),
            compiler_params=compiler_params,
        )(x3d)
        return out.reshape(orig_shape)

    # Ragged feature count: normalize the 2D (N, F) view directly. Boundary
    # blocks are handled by Pallas' masked stores -> no pad/slice round-trip.
    x2d = x.reshape(n, f)
    tf = _tile_f_2d(n, f, itemsize, tile_cols)
    out = pl.pallas_call(
        kernel,
        out_shape=jax.ShapeDtypeStruct((n, f), orig_dtype),
        grid_spec=pltpu.PrefetchScalarGridSpec(
            num_scalar_prefetch=0,
            grid=(pl.cdiv(f, tf),),
            in_specs=[pl.BlockSpec((n, tf), lambda j: (0, j))],
            out_specs=pl.BlockSpec((n, tf), lambda j: (0, j)),
        ),
        compiler_params=compiler_params,
    )(x2d)
    return out.reshape(orig_shape)


def _reference(x, min_val=0.0, max_val=1.0):
    x_min = jnp.min(x, axis=0, keepdims=True)
    x_max = jnp.max(x, axis=0, keepdims=True)
    x_norm = (x - x_min) / (x_max - x_min + 1e-10)
    return x_norm * (max_val - min_val) + min_val


if __name__ == "__main__":
    key = jax.random.PRNGKey(0)

    # Small NCHW-style input consistent with the module usage (normalize over
    # batch): F = 4*16*16 = 1024 -> lane-aligned single-block fast path.
    x = jax.random.normal(key, (2, 4, 16, 16), dtype=jnp.float32)
    out = jax.block_until_ready(min_max_normalize(x, 0.0, 1.0))
    ref = _reference(x, 0.0, 1.0)
    assert out.shape == x.shape and out.dtype == x.dtype
    assert jnp.allclose(out, ref, atol=1e-5, rtol=1e-5)

    # Ragged feature count (F = 105, not a multiple of 128): 2D path,
    # single full-extent block, no padding.
    x2 = jax.random.normal(jax.random.PRNGKey(0), (2, 3, 5, 7), dtype=jnp.float32)
    out2 = jax.block_until_ready(min_max_normalize(x2, -1.0, 1.0))
    ref2 = _reference(x2, -1.0, 1.0)
    assert jnp.allclose(out2, ref2, atol=1e-5, rtol=1e-5)

    # Forced small tile: lane-aligned multi-block pipelined grid path.
    x3 = jax.random.normal(jax.random.PRNGKey(0), (2, 4, 32, 32), dtype=jnp.float32)
    out3 = jax.block_until_ready(min_max_normalize(x3, 0.0, 1.0, tile_cols=1024))
    ref3 = _reference(x3, 0.0, 1.0)
    assert jnp.allclose(out3, ref3, atol=1e-5, rtol=1e-5)

    # Forced small tile on a ragged F (F = 300): 2D multi-block path with a
    # masked boundary block.
    x4 = jax.random.normal(jax.random.PRNGKey(0), (4, 3, 10, 10), dtype=jnp.float32)
    out4 = jax.block_until_ready(min_max_normalize(x4, 0.0, 1.0, tile_cols=128))
    ref4 = _reference(x4, 0.0, 1.0)
    assert jnp.allclose(out4, ref4, atol=1e-5, rtol=1e-5)

    print("KERNEL_OK")
</pallas_src>

<mosaic_0001>
module attributes {stable_mosaic.version = 11 : i64} {
  func.func @_minmax_kernel(%arg0: i32, %arg1: memref<2x8x128xf32, #tpu.memory_space<vmem>>, %arg2: memref<2x8x128xf32, #tpu.memory_space<vmem>>) attributes {dimension_semantics = [#tpu.dimension_semantics<parallel>], iteration_bounds = array<i64: 1>, scalar_prefetch = 0 : i64, scratch_operands = 0 : i64, tpu.core_type = #tpu.core_type<tc>, window_params = [{transform_indices = @transform_0, window_bounds = array<i64: 2, 8, 128>}, {transform_indices = @transform_1, window_bounds = array<i64: 2, 8, 128>}]} {
    %c0 = arith.constant 0 : index
    %c0_0 = arith.constant 0 : index
    %c0_1 = arith.constant 0 : index
    %0 = vector.load %arg1[%c0, %c0_0, %c0_1] : memref<2x8x128xf32, #tpu.memory_space<vmem>>, vector<2x8x128xf32>
    %cst = arith.constant dense<0x7F800000> : vector<8x128xf32>
    %1 = vector.multi_reduction <minimumf>, %0, %cst [0] : vector<2x8x128xf32> to vector<8x128xf32>
    %2 = vector.shape_cast %1 : vector<8x128xf32> to vector<1x8x128xf32>
    %cst_2 = arith.constant dense<0xFF800000> : vector<8x128xf32>
    %3 = vector.multi_reduction <maximumf>, %0, %cst_2 [0] : vector<2x8x128xf32> to vector<8x128xf32>
    %4 = vector.shape_cast %3 : vector<8x128xf32> to vector<1x8x128xf32>
    %5 = arith.subf %4, %2 : vector<1x8x128xf32>
    %cst_3 = arith.constant 1.000000e-10 : f32
    %6 = vector.broadcast %cst_3 : f32 to vector<1x8x128xf32>
    %7 = arith.addf %5, %6 : vector<1x8x128xf32>
    %8 = tpu.reciprocal %7 : vector<1x8x128xf32> -> vector<1x8x128xf32>
    %cst_4 = arith.constant 1.000000e+00 : f32
    %9 = vector.broadcast %cst_4 : f32 to vector<1x8x128xf32>
    %10 = arith.mulf %9, %8 : vector<1x8x128xf32>
    %11 = vector.broadcast %2 : vector<1x8x128xf32> to vector<2x8x128xf32>
    %12 = arith.subf %0, %11 : vector<2x8x128xf32>
    %13 = vector.broadcast %10 : vector<1x8x128xf32> to vector<2x8x128xf32>
    %14 = arith.mulf %12, %13 : vector<2x8x128xf32>
    %cst_5 = arith.constant 0.000000e+00 : f32
    %15 = vector.broadcast %cst_5 : f32 to vector<2x8x128xf32>
    %16 = arith.addf %14, %15 : vector<2x8x128xf32>
    %c0_6 = arith.constant 0 : index
    %c0_7 = arith.constant 0 : index
    %c0_8 = arith.constant 0 : index
    %17 = vector.load %arg2[%c0_6, %c0_7, %c0_8] : memref<2x8x128xf32, #tpu.memory_space<vmem>>, vector<2x8x128xf32>
    tpu.vector_store %arg2[%c0_6, %c0_7, %c0_8], %16 {strides = array<i32>} : memref<2x8x128xf32, #tpu.memory_space<vmem>>, vector<2x8x128xf32>,
    return
  }
  func.func @transform_0(%arg0: i32) -> (i32, i32, i32) {
    %c0_i32 = arith.constant 0 : i32
    %c0_i32_0 = arith.constant 0 : i32
    %c0_i32_1 = arith.constant 0 : i32
    return %c0_i32, %arg0, %c0_i32_0 : i32, i32, i32
  }
  func.func @transform_1(%arg0: i32) -> (i32, i32, i32) {
    %c0_i32 = arith.constant 0 : i32
    %c0_i32_0 = arith.constant 0 : i32
    %c0_i32_1 = arith.constant 0 : i32
    return %c0_i32, %arg0, %c0_i32_0 : i32, i32, i32
  }
}

</mosaic_0001>

<llo_original>
// kernel: tpu_custom_call.1
$region0: #{tpu_custom_call.1}
  #allocation0 [shape = 'u32[]', space=smem, size = 0x4, offset = 0x4, fixed_abs, tag = 'smem constant byte address 0x4 - core index']
  #allocation1 [shape = 'u32[144,128]{1,0:T(1,128)}', space=vmem, size = 0x12000, scoped, tag = 'internal scratch']
  %s0 = inlined_call_operand.hbm [shape: f32[2,8,128], index: 0, kind: input, shape index: {}]
  %s1 = inlined_call_operand.hbm [shape: f32[2,8,128], index: 1, kind: output, shape index: {}]
  %s2 = sld [smem:[#allocation0]]
  $region18: #{tpu_custom_call.1} parent=0
    _
  %s4 = ssub.s32 1, %s2
  %s5 = scalar_select 0, %s4, %s2
  $region1: #{tpu_custom_call.1} parent=0
    #allocation2 [shape = 'u8[8192]{0}', space=vmem, size = 0x2000, scoped, tag = 'input window, operand 0, single buffered']
    #allocation3 [shape = 's32[1]{0}', space=sflag, size = 0x4, scoped, tag = 'scoped memory for tpu_custom_call.1']
    #allocation4 [shape = 's32[1]{0}', space=sflag, size = 0x4, scoped, tag = 'scoped memory for tpu_custom_call.1']
    #allocation5 [shape = 'u8[8192]{0}', space=vmem, size = 0x2000, scoped, tag = 'output window, operand 0, single buffered']
    %6 = vsyncpa [#allocation3], 0
    %7 = vsyncpa [#allocation4], 0
    // Predicated region
    $region2: #{tpu_custom_call.1} parent=1 // pred_check
      _
    $region3: #{tpu_custom_call.1} parent=1 // pred_check_branch
      %9 = sbr.rel (0) target = $region5
    $region4: #{tpu_custom_call.1} parent=1 // pred_region
      %s11 = ssub.s32 256, 256
      %12 = vsyncadd [#allocation3], %s11
      %s13 = sshll.u32 [#allocation2], 4
      %s14 = int_to_ptr.vmem [resolvable:$true] %s13
      %19 = dma.hbm_to_vmem [thread:$0]  %s0, 256, %s14, [#allocation3], 128, 128, 8
    $region5: #{tpu_custom_call.1} parent=1 // pred_fallthru
      _
    // Predicated region
    $region6: #{tpu_custom_call.1} parent=1 // pred_check
      _
    $region7: #{tpu_custom_call.1} parent=1 // pred_check_branch
      %21 = sbr.rel (0) target = $region9
    $region8: #{tpu_custom_call.1} parent=1 // pred_region
      %22 = dma.done [#allocation3], 256
    $region9: #{tpu_custom_call.1} parent=1 // pred_fallthru
      _
    %v23 = vld [vmem:[#allocation2] sm:$0xff]
    %v24 = vld [vmem:[#allocation2 + $0x8] sm:$0xff]
    %v25 = vmin.f32 %v23, %v24
    %v26 = vmax.f32 %v23, %v24
    %v27 = vsub.f32 %v26, %v25
    %v28 = vadd.f32 %v27, 1e-10
    %v29 = vrcp.pop %v28
    %v30 = vsub.f32 %v23, %v25
    %v31 = vsub.f32 %v24, %v25
    %v32 = vmul.f32 %v30, %v29
    %v33 = vmul.f32 %v31, %v29
    %v34 = vadd.f32 %v32, 0.0
    %v35 = vadd.f32 %v33, 0.0
    %36 = vst [vmem:[#allocation5] sm:$0xff] %v34
    %37 = vst [vmem:[#allocation5 + $0x8] sm:$0xff] %v35
    // Predicated region
    $region10: #{tpu_custom_call.1} parent=1 // pred_check
      _
    $region11: #{tpu_custom_call.1} parent=1 // pred_check_branch
      %39 = sbr.rel (0) target = $region13
    $region12: #{tpu_custom_call.1} parent=1 // pred_region
      %s41 = ssub.s32 256, 256
      %42 = vsyncadd [#allocation4], %s41
      %s43 = sshll.u32 [#allocation5], 4
      %s44 = int_to_ptr.vmem [resolvable:$true] %s43
      %49 = dma.vmem_to_hbm [thread:$0]  %s44, 256, %s1, [#allocation4], 128, 128, 8
    $region13: #{tpu_custom_call.1} parent=1 // pred_fallthru
      _
    // Predicated region
    $region14: #{tpu_custom_call.1} parent=1 // pred_check
      _
    $region15: #{tpu_custom_call.1} parent=1 // pred_check_branch
      %51 = sbr.rel (0) target = $region17
    $region16: #{tpu_custom_call.1} parent=1 // pred_region
      %52 = dma.done [#allocation4], 256
    $region17: #{tpu_custom_call.1} parent=1 // pred_fallthru
      _
    %53 = vsyncpa [#allocation3], 1
    %54 = vsyncpa [#allocation4], 1

</llo_original>
